<compile_context>
chip_gen: v7x
topology: tpu7x:2x2x1
jax: 0.10.0
libtpu: 0.0.40
codegen_flags: <defaults>
</compile_context>

<pallas_src>
import jax
import jax.numpy as jnp
from jax.experimental import pallas as pl
from jax.experimental.pallas import tpu as pltpu


_GATHER_INFLIGHT = 8   # in-flight per-row DMAs in the large-vocab gather path


def _round_up(x: int, m: int) -> int:
    return ((x + m - 1) // m) * m


def _pick_tile(n8: int, max_tile: int) -> int:
    """Largest multiple-of-8 divisor of n8 (itself a multiple of 8) <= max_tile."""
    max_tile = max(8, (max_tile // 8) * 8)
    if n8 <= max_tile:
        return n8
    for cand in range(max_tile, 7, -8):
        if n8 % cand == 0:
            return cand
    return 8


def _vmem_limit_bytes(need: int) -> int:
    # Explicit scoped-VMEM budget: at least the per-generation defaults
    # (16/32/32 MiB on v5e/v6e/v7x), never above v7x's 64 MiB physical VMEM.
    return int(min(64 * 1024 * 1024, max(32 * 1024 * 1024, 2 * need)))


def _split_table_bf16(table_f32: jax.Array, n_splits: int) -> jax.Array:
    """bf16 decomposition; sum of parts reconstructs f32 to <= ~1 ulp for 3 parts."""
    parts = []
    residual = table_f32
    for _ in range(n_splits):
        part = residual.astype(jnp.bfloat16)
        parts.append(part)
        residual = residual - part.astype(jnp.float32)
    return jnp.stack(parts, axis=0)            # (n_splits, V, D) bf16


def _embedding_onehot_kernel(ids_ref, tables_ref, out_ref):
    # ids_ref:    (TQ, 1)           int32 token ids for this tile (VMEM).
    # tables_ref: (n_splits, V, D)  bf16 split table, whole-array VMEM resident.
    # out_ref:    (TQ, D)           dense output tile.
    ids = ids_ref[...]
    tq = out_ref.shape[0]
    n_splits, v, _ = tables_ref.shape
    vocab_iota = jax.lax.broadcasted_iota(jnp.int32, (tq, v), 1)    # (TQ, V)
    # A 0/1 one-hot is exact in bf16 -> each matmul is one DEFAULT-precision
    # MXU pass; accumulating the bf16 table parts in f32 reconstructs the
    # f32 rows to <= ~1 ulp (vs 3-6 passes for precision=HIGHEST).
    onehot = (ids == vocab_iota).astype(jnp.bfloat16)               # (TQ, V)
    acc = jnp.dot(onehot, tables_ref[0], preferred_element_type=jnp.float32)
    for part in range(1, n_splits):
        acc = acc + jnp.dot(onehot, tables_ref[part],
                            preferred_element_type=jnp.float32)
    out_ref[...] = acc.astype(out_ref.dtype)


def _embedding_dma_gather_kernel(ids_ref, table_ref, out_ref, rows_ref, sems):
    # ids_ref:   (N_pad,) int32 token ids, scalar-prefetched into SMEM.
    # table_ref: (V, D)   embedding table left in HBM (memory_space=ANY).
    # out_ref:   (TQ, D)  dense output tile (VMEM).
    # rows_ref:  (TQ, D)  VMEM scratch filled row-by-row via DMA.
    # sems:      (_GATHER_INFLIGHT,) DMA semaphores, one per in-flight copy.
    tq = out_ref.shape[0]
    nbuf = min(_GATHER_INFLIGHT, tq)
    base = pl.program_id(0) * tq

    def row_copy(src_row, dst_row, slot):
        return pltpu.make_async_copy(
            table_ref.at[pl.ds(src_row, 1)],
            rows_ref.at[pl.ds(dst_row, 1)],
            sems.at[slot],
        )

    # Prime: nbuf row fetches in flight.
    @pl.loop(0, nbuf)
    def _prime(t):
        row_copy(ids_ref[base + t], t, t).start()

    # Steady state: retire the oldest copy on a slot, reuse it for the next row.
    @pl.loop(nbuf, tq)
    def _steady(t):
        slot = t % nbuf
        row_copy(0, 0, slot).wait()          # same shape => same sem amount
        row_copy(ids_ref[base + t], t, slot).start()

    # Drain: exactly one outstanding copy remains per slot.
    @pl.loop(0, nbuf)
    def _drain(slot):
        row_copy(0, 0, slot).wait()

    out_ref[...] = rows_ref[...]


def input_embedding(token_ids: jax.Array, emb_table: jax.Array, *,
                    tokens_per_tile: int = 1024,
                    max_resident_table_bytes: int = 24 * 1024 * 1024) -> jax.Array:
    """Pallas equivalent of nn.Embedding(len(vocab), dim)(token_ids)."""
    B, S = token_ids.shape
    V, D = emb_table.shape
    N = B * S
    itemsize = emb_table.dtype.itemsize

    # bf16 parts needed to reconstruct the table (~exactly) on the MXU path.
    n_splits = 1 if emb_table.dtype == jnp.bfloat16 else 3
    resident_bytes = n_splits * V * D * 2

    # Resident one-hot path only while the split table fits comfortably in
    # VMEM *and* the O(TQ*V) one-hot work stays cheaper than a row gather.
    use_onehot = (resident_bytes <= max_resident_table_bytes) and (V <= 4096)

    # Clamp out-of-range ids (nn.Embedding would raise; avoid OOB access).
    ids_flat = jnp.clip(token_ids.reshape(N).astype(jnp.int32), 0, V - 1)

    # Token-tile size: prefer a divisor of round_up(N, 8) so N_pad == N and
    # the write-bound output needs no wrapper-side slice copy.
    if use_onehot:
        # Keep the per-step (TQ, V) iota + one-hot intermediates ~<= 8 MiB.
        tile_cap = min(tokens_per_tile, max(64, (8 * 1024 * 1024) // (6 * V)))
    else:
        tile_cap = tokens_per_tile
    n8 = _round_up(N, 8)
    tq = _pick_tile(n8, tile_cap)
    if tq < 64 and n8 > tile_cap:
        # No decent divisor: pad to dense tiles and slice once at the end.
        tq = max(64, (tile_cap // 8) * 8)
    n_pad = _round_up(n8, tq)
    ids_pad = jnp.pad(ids_flat, (0, n_pad - N))      # padded with valid id 0

    if use_onehot:
        tables = _split_table_bf16(emb_table.astype(jnp.float32), n_splits)
        vmem_need = (resident_bytes             # split table, single-buffered
                     + 2 * tq * 4               # double-buffered id column
                     + 2 * tq * D * itemsize    # double-buffered output tile
                     + tq * V * 6               # i32 iota + bf16 one-hot
                     + tq * D * 4)              # f32 accumulator
        out_flat = pl.pallas_call(
            _embedding_onehot_kernel,
            out_shape=jax.ShapeDtypeStruct((n_pad, D), emb_table.dtype),
            grid_spec=pltpu.PrefetchScalarGridSpec(
                num_scalar_prefetch=0,
                grid=(n_pad // tq,),
                in_specs=[
                    pl.BlockSpec((tq, 1), lambda i: (i, 0)),
                    # Whole split table resident in VMEM: fetched from HBM
                    # once, single-buffered (no per-step double buffer).
                    pl.BlockSpec(memory_space=pltpu.MemorySpace.VMEM),
                ],
                out_specs=pl.BlockSpec((tq, D), lambda i: (i, 0)),
            ),
            compiler_params=pltpu.CompilerParams(
                dimension_semantics=("parallel",),     # 2-TC split on v7x
                vmem_limit_bytes=_vmem_limit_bytes(vmem_need),
            ),
        )(ids_pad.reshape(n_pad, 1), tables)
    else:
        # Large-vocab fallback: table stays in HBM; per-row DMA gather.
        vmem_need = (tq * D * itemsize              # row-gather scratch tile
                     + 2 * tq * D * itemsize        # double-buffered output tile
                     + 64 * 1024)
        out_flat = pl.pallas_call(
            _embedding_dma_gather_kernel,
            out_shape=jax.ShapeDtypeStruct((n_pad, D), emb_table.dtype),
            grid_spec=pltpu.PrefetchScalarGridSpec(
                num_scalar_prefetch=1,              # token ids -> SMEM
                grid=(n_pad // tq,),
                in_specs=[pl.BlockSpec(memory_space=pl.ANY)],   # table in HBM
                out_specs=pl.BlockSpec((tq, D), lambda i, ids: (i, 0)),
                scratch_shapes=[
                    pltpu.VMEM((tq, D), emb_table.dtype),
                    pltpu.SemaphoreType.DMA((_GATHER_INFLIGHT,)),
                ],
            ),
            compiler_params=pltpu.CompilerParams(
                dimension_semantics=("arbitrary",),
                vmem_limit_bytes=_vmem_limit_bytes(vmem_need),
            ),
        )(ids_pad, emb_table)

    if n_pad != N:
        # Only hit when B*S has no tile-aligned factorization; costs one
        # extra pass over the output (documented trade-off).
        out_flat = out_flat[:N]
    return out_flat.reshape(B, S, D)


if __name__ == "__main__":
    # Small synthetic setup consistent with the module:
    #   vocab size = 64, dim = 512 (module default), batch = 2, seq = 8.
    VOCAB = 64
    DIM = 512
    B, S = 2, 8

    key = jax.random.PRNGKey(0)
    k_emb, k_ids = jax.random.split(key)

    # Deterministic parameter init (nn.Embedding weight ~ N(0, 1)).
    emb_table = jax.random.normal(k_emb, (VOCAB, DIM), dtype=jnp.float32)
    # "Tokenized" input: deterministic int ids in [0, VOCAB).
    token_ids = jax.random.randint(k_ids, (B, S), 0, VOCAB, dtype=jnp.int32)

    # Reference (== torch nn.Embedding lookup).
    ref = jnp.take(emb_table, token_ids, axis=0)

    # Small vocab -> VMEM-resident one-hot MXU path.
    out = jax.block_until_ready(input_embedding(token_ids, emb_table))
    assert out.shape == (B, S, DIM), out.shape
    assert out.dtype == emb_table.dtype, out.dtype
    assert jnp.allclose(out, ref, rtol=1e-5, atol=1e-5), \
        "one-hot path mismatch vs reference embedding lookup"

    # Force the large-vocab HBM row-gather (manual DMA) fallback on the same
    # data to exercise that path too; raw row copies, hence bit-exact.
    out_gather = jax.block_until_ready(
        input_embedding(token_ids, emb_table, max_resident_table_bytes=0))
    assert out_gather.shape == (B, S, DIM), out_gather.shape
    assert bool(jnp.all(out_gather == ref)), \
        "DMA-gather path mismatch vs reference embedding lookup"

    print("KERNEL_OK")
</pallas_src>

<mosaic_0001>
module attributes {stable_mosaic.version = 11 : i64} {
  func.func @_embedding_onehot_kernel(%arg0: i32, %arg1: memref<16x1xi32, #tpu.memory_space<vmem>>, %arg2: memref<3x64x512xbf16, #tpu.memory_space<vmem>>, %arg3: memref<16x512xf32, #tpu.memory_space<vmem>>) attributes {dimension_semantics = [#tpu.dimension_semantics<parallel>], iteration_bounds = array<i64: 1>, scalar_prefetch = 0 : i64, scratch_operands = 0 : i64, tpu.core_type = #tpu.core_type<tc>, window_params = [{transform_indices = @transform_0, window_bounds = array<i64: 16, 1>}, {pipeline_mode = #tpu.pipeline_mode<synchronous>, transform_indices = @transform_1, window_bounds = array<i64: 3, 64, 512>}, {transform_indices = @transform_2, window_bounds = array<i64: 16, 512>}]} {
    %c0 = arith.constant 0 : index
    %c0_0 = arith.constant 0 : index
    %0 = vector.load %arg1[%c0, %c0_0] : memref<16x1xi32, #tpu.memory_space<vmem>>, vector<16x1xi32>
    %1 = tpu.iota {dimensions = array<i32: 1>} : vector<16x64xi32>
    %2 = vector.broadcast %0 : vector<16x1xi32> to vector<16x64xi32>
    %3 = arith.cmpi eq, %2, %1 : vector<16x64xi32>
    %4 = arith.extui %3 : vector<16x64xi1> to vector<16x64xi32>
    %5 = arith.sitofp %4 : vector<16x64xi32> to vector<16x64xf32>
    %6 = arith.truncf %5 : vector<16x64xf32> to vector<16x64xbf16>
    %c0_1 = arith.constant 0 : index
    %c0_2 = arith.constant 0 : index
    %c0_3 = arith.constant 0 : index
    %7 = vector.load %arg2[%c0_1, %c0_2, %c0_3] : memref<3x64x512xbf16, #tpu.memory_space<vmem>>, vector<1x64x512xbf16>
    %8 = vector.shape_cast %7 : vector<1x64x512xbf16> to vector<64x512xbf16>
    %cst = arith.constant dense<0.000000e+00> : vector<16x512xf32>
    %9 = tpu.matmul %6, %8, %cst {dimension_numbers = #tpu.dot_dimension_numbers<[1], [0], [0], [1], [0, 0, 1, 1], [], []>} : vector<16x64xbf16>, vector<64x512xbf16>, vector<16x512xf32> -> vector<16x512xf32>
    %c1 = arith.constant 1 : index
    %c0_4 = arith.constant 0 : index
    %c0_5 = arith.constant 0 : index
    %10 = vector.load %arg2[%c1, %c0_4, %c0_5] : memref<3x64x512xbf16, #tpu.memory_space<vmem>>, vector<1x64x512xbf16>
    %11 = vector.shape_cast %10 : vector<1x64x512xbf16> to vector<64x512xbf16>
    %cst_6 = arith.constant dense<0.000000e+00> : vector<16x512xf32>
    %12 = tpu.matmul %6, %11, %cst_6 {dimension_numbers = #tpu.dot_dimension_numbers<[1], [0], [0], [1], [0, 0, 1, 1], [], []>} : vector<16x64xbf16>, vector<64x512xbf16>, vector<16x512xf32> -> vector<16x512xf32>
    %13 = arith.addf %9, %12 : vector<16x512xf32>
    %c2 = arith.constant 2 : index
    %c0_7 = arith.constant 0 : index
    %c0_8 = arith.constant 0 : index
    %14 = vector.load %arg2[%c2, %c0_7, %c0_8] : memref<3x64x512xbf16, #tpu.memory_space<vmem>>, vector<1x64x512xbf16>
    %15 = vector.shape_cast %14 : vector<1x64x512xbf16> to vector<64x512xbf16>
    %cst_9 = arith.constant dense<0.000000e+00> : vector<16x512xf32>
    %16 = tpu.matmul %6, %15, %cst_9 {dimension_numbers = #tpu.dot_dimension_numbers<[1], [0], [0], [1], [0, 0, 1, 1], [], []>} : vector<16x64xbf16>, vector<64x512xbf16>, vector<16x512xf32> -> vector<16x512xf32>
    %17 = arith.addf %13, %16 : vector<16x512xf32>
    %c0_10 = arith.constant 0 : index
    %c0_11 = arith.constant 0 : index
    %18 = vector.load %arg3[%c0_10, %c0_11] : memref<16x512xf32, #tpu.memory_space<vmem>>, vector<16x512xf32>
    tpu.vector_store %arg3[%c0_10, %c0_11], %17 {strides = array<i32>} : memref<16x512xf32, #tpu.memory_space<vmem>>, vector<16x512xf32>,
    return
  }
  func.func @transform_0(%arg0: i32) -> (i32, i32) {
    %c0_i32 = arith.constant 0 : i32
    %c0_i32_0 = arith.constant 0 : i32
    return %arg0, %c0_i32 : i32, i32
  }
  func.func @transform_1(%arg0: i32) -> (i32, i32, i32) {
    %c0_i32 = arith.constant 0 : i32
    %c0_i32_0 = arith.constant 0 : i32
    %c0_i32_1 = arith.constant 0 : i32
    %c0_i32_2 = arith.constant 0 : i32
    return %c0_i32, %c0_i32_0, %c0_i32_1 : i32, i32, i32
  }
  func.func @transform_2(%arg0: i32) -> (i32, i32) {
    %c0_i32 = arith.constant 0 : i32
    %c0_i32_0 = arith.constant 0 : i32
    return %arg0, %c0_i32 : i32, i32
  }
}

</mosaic_0001>

<llo_original>
// kernel: tpu_custom_call.1
$region0: #{tpu_custom_call.1}
  #allocation0 [shape = 'u32[]', space=smem, size = 0x4, offset = 0x4, fixed_abs, tag = 'smem constant byte address 0x4 - core index']
  #allocation1 [shape = 'u32[144,128]{1,0:T(1,128)}', space=vmem, size = 0x12000, scoped, tag = 'internal scratch']
  %s0 = inlined_call_operand.vmem [shape: s32[16,1], index: 0, kind: input, shape index: {}]
  %s1 = inlined_call_operand.hbm [shape: bf16[3,64,512], index: 1, kind: input, shape index: {}]
  %s2 = inlined_call_operand.hbm [shape: f32[16,512], index: 2, kind: output, shape index: {}]
  %s3 = sld [smem:[#allocation0]]
  $region22: #{tpu_custom_call.1} parent=0
    _
  %s5 = ssub.s32 1, %s3
  %s6 = scalar_select 0, %s5, %s3
  $region1: #{tpu_custom_call.1} parent=0
    #allocation2 [shape = 'u8[196608]{0}', space=vmem, size = 0x30000, scoped, tag = 'input window, operand 1, single buffered']
    #allocation3 [shape = 's32[1]{0}', space=sflag, size = 0x4, scoped, tag = 'scoped memory for tpu_custom_call.1']
    #allocation4 [shape = 's32[1]{0}', space=sflag, size = 0x4, scoped, tag = 'scoped memory for tpu_custom_call.1']
    #allocation5 [shape = 'u8[32768]{0}', space=vmem, size = 0x8000, scoped, tag = 'output window, operand 0, single buffered']
    %7 = vsyncpa [#allocation3], 0
    %8 = vsyncpa [#allocation4], 0
    // Predicated region
    $region2: #{tpu_custom_call.1} parent=1 // pred_check
      _
    $region3: #{tpu_custom_call.1} parent=1 // pred_check_branch
      %10 = sbr.rel (0) target = $region5
    $region4: #{tpu_custom_call.1} parent=1 // pred_region
      _
    $region5: #{tpu_custom_call.1} parent=1 // pred_fallthru
      _
    // Predicated region
    $region6: #{tpu_custom_call.1} parent=1 // pred_check
      _
    $region7: #{tpu_custom_call.1} parent=1 // pred_check_branch
      %12 = sbr.rel (0) target = $region9
    $region8: #{tpu_custom_call.1} parent=1 // pred_region
      %s14 = ssub.s32 6144, 6144
      %15 = vsyncadd [#allocation3], %s14
      %s16 = sshll.u32 [#allocation2], 4
      %s17 = int_to_ptr.vmem [resolvable:$true] %s16
      %22 = dma.hbm_to_vmem [thread:$0]  %s1, 6144, %s17, [#allocation3], 256, 256, 16
    $region9: #{tpu_custom_call.1} parent=1 // pred_fallthru
      _
    // Predicated region
    $region10: #{tpu_custom_call.1} parent=1 // pred_check
      _
    $region11: #{tpu_custom_call.1} parent=1 // pred_check_branch
      %24 = sbr.rel (0) target = $region13
    $region12: #{tpu_custom_call.1} parent=1 // pred_region
      %25 = dma.done [#allocation3], 6144
    $region13: #{tpu_custom_call.1} parent=1 // pred_fallthru
      _
    %v27 = vld [vmem:[%s0] sm:$0xff]
    %v28 = vld [vmem:[%s0 + $0x8] sm:$0xff]
    %v29 = vlaneseq
    %v30 = vand.u32 %v29, 127
    %31 = vset.pattern.permute.xlu0 0
    %32 = vperm.xlu0 %31, %v27
    %v33 = vpop.permute.xlu0 %32
    %34 = vset.pattern.permute.xlu0 0
    %35 = vperm.xlu0 %34, %v28
    %v36 = vpop.permute.xlu0 %35
    %vm37 = vcmp.eq.s32.totalorder %v33, %v30
    %vm38 = vcmp.eq.s32.totalorder %v36, %v30
    %v39 = vsel %vm37, 1, 0
    %v40 = vsel %vm38, 1, 0
    %v41 = vcvt.s32.f32 %v39
    %v42 = vcvt.s32.f32 %v40
    %v43 = vpack.c.bf16 %v42, %v41
    %v44 = vld [vmem:[#allocation2] sm:$0xff]
    %v45 = vld [vmem:[#allocation2 + $0x8] sm:$0xff]
    %v46 = vld [vmem:[#allocation2 + $0x10] sm:$0xff]
    %v47 = vld [vmem:[#allocation2 + $0x18] sm:$0xff]
    %v48 = vld [vmem:[#allocation2 + $0x20] sm:$0xff]
    %v49 = vld [vmem:[#allocation2 + $0x28] sm:$0xff]
    %v50 = vld [vmem:[#allocation2 + $0x30] sm:$0xff]
    %v51 = vld [vmem:[#allocation2 + $0x38] sm:$0xff]
    %v52 = vld [vmem:[#allocation2 + $0x40] sm:$0xff]
    %v53 = vld [vmem:[#allocation2 + $0x48] sm:$0xff]
    %v54 = vld [vmem:[#allocation2 + $0x50] sm:$0xff]
    %v55 = vld [vmem:[#allocation2 + $0x58] sm:$0xff]
    %v56 = vld [vmem:[#allocation2 + $0x60] sm:$0xff]
    %v57 = vld [vmem:[#allocation2 + $0x68] sm:$0xff]
    %v58 = vld [vmem:[#allocation2 + $0x70] sm:$0xff]
    %v59 = vld [vmem:[#allocation2 + $0x78] sm:$0xff]
    %s60 = scalar_lea.vmem [#allocation2], 128
    %v61 = vld [vmem:[%s60] sm:$0xff]
    %v62 = vld [vmem:[%s60 + $0x8] sm:$0xff]
    %v63 = vld [vmem:[%s60 + $0x10] sm:$0xff]
    %v64 = vld [vmem:[%s60 + $0x18] sm:$0xff]
    %v65 = vld [vmem:[%s60 + $0x20] sm:$0xff]
    %v66 = vld [vmem:[%s60 + $0x28] sm:$0xff]
    %v67 = vld [vmem:[%s60 + $0x30] sm:$0xff]
    %v68 = vld [vmem:[%s60 + $0x38] sm:$0xff]
    %v69 = vld [vmem:[%s60 + $0x40] sm:$0xff]
    %v70 = vld [vmem:[%s60 + $0x48] sm:$0xff]
    %v71 = vld [vmem:[%s60 + $0x50] sm:$0xff]
    %v72 = vld [vmem:[%s60 + $0x58] sm:$0xff]
    %v73 = vld [vmem:[%s60 + $0x60] sm:$0xff]
    %v74 = vld [vmem:[%s60 + $0x68] sm:$0xff]
    %v75 = vld [vmem:[%s60 + $0x70] sm:$0xff]
    %v76 = vld [vmem:[%s60 + $0x78] sm:$0xff]
    %v93 = vunpack.c.l.b16 %v61
    %v94 = vunpack.c.h.b16 %v61
    %v95 = vunpack.c.l.b16 %v62
    %v96 = vunpack.c.h.b16 %v62
    %v97 = vunpack.c.l.b16 %v63
    %v98 = vunpack.c.h.b16 %v63
    %v99 = vunpack.c.l.b16 %v64
    %v100 = vunpack.c.h.b16 %v64
    %v101 = vunpack.c.l.b16 %v65
    %v102 = vunpack.c.h.b16 %v65
    %v103 = vunpack.c.l.b16 %v66
    %v104 = vunpack.c.h.b16 %v66
    %v105 = vunpack.c.l.b16 %v67
    %v106 = vunpack.c.h.b16 %v67
    %v107 = vunpack.c.l.b16 %v68
    %v108 = vunpack.c.h.b16 %v68
    %v109 = vunpack.c.l.b16 %v69
    %v110 = vunpack.c.h.b16 %v69
    %v111 = vunpack.c.l.b16 %v70
    %v112 = vunpack.c.h.b16 %v70
    %v113 = vunpack.c.l.b16 %v71
    %v114 = vunpack.c.h.b16 %v71
    %v115 = vunpack.c.l.b16 %v72
    %v116 = vunpack.c.h.b16 %v72
    %v117 = vunpack.c.l.b16 %v73
    %v118 = vunpack.c.h.b16 %v73
    %v119 = vunpack.c.l.b16 %v74
    %v120 = vunpack.c.h.b16 %v74
    %v121 = vunpack.c.l.b16 %v75
    %v122 = vunpack.c.h.b16 %v75
    %v123 = vunpack.c.l.b16 %v76
    %v124 = vunpack.c.h.b16 %v76
    %v125 = vpack.c.b16 %v97, %v93
    %v126 = vpack.c.b16 %v98, %v94
    %v127 = vpack.c.b16 %v99, %v95
    %v128 = vpack.c.b16 %v100, %v96
    %v129 = vpack.c.b16 %v105, %v101
    %v130 = vpack.c.b16 %v106, %v102
    %v131 = vpack.c.b16 %v107, %v103
    %v132 = vpack.c.b16 %v108, %v104
    %v133 = vpack.c.b16 %v113, %v109
    %v134 = vpack.c.b16 %v114, %v110
    %v135 = vpack.c.b16 %v115, %v111
    %v136 = vpack.c.b16 %v116, %v112
    %v137 = vpack.c.b16 %v121, %v117
    %v138 = vpack.c.b16 %v122, %v118
    %v139 = vpack.c.b16 %v123, %v119
    %v140 = vpack.c.b16 %v124, %v120
    %vm157 = vcmask 523264
    %v159 = vsel %vm157, %v43, 0
    %161 = vmatprep.subr.bf16.mxu0 %v126
    %162 = vmatpush1.bf16.msra.mxu0 %v125
    %163 = vmatprep.subr.bf16.mxu0 %v130
    %164 = vmatpush1.bf16.msra.mxu0 %v129
    %165 = vmatprep.subr.bf16.mxu0 %v134
    %166 = vmatpush1.bf16.msra.mxu0 %v133
    %167 = vmatprep.subr.bf16.mxu0 %v138
    %168 = vmatpush1.bf16.msra.mxu0 %v137
    %169 = vmatprep.subr.bf16.mxu0 0
    %170 = vmatpush1.bf16.msra.mxu0 0
    %171 = vmatprep.subr.bf16.mxu0 0
    %172 = vmatpush1.bf16.msra.mxu0 0
    %173 = vmatprep.subr.bf16.mxu0 0
    %174 = vmatpush1.bf16.msra.mxu0 0
    %175 = vmatprep.subr.bf16.mxu0 0
    %176 = vmatpush1.bf16.msra.mxu0 0
    %177 = vmatprep.subr.bf16.mxu0 0
    %178 = vmatpush1.bf16.msra.mxu0 0
    %179 = vmatprep.subr.bf16.mxu0 0
    %180 = vmatpush1.bf16.msra.mxu0 0
    %181 = vmatprep.subr.bf16.mxu0 0
    %182 = vmatpush1.bf16.msra.mxu0 0
    %183 = vmatprep.subr.bf16.mxu0 0
    %184 = vmatpush1.bf16.msra.mxu0 0
    %185 = vmatprep.subr.bf16.mxu0 0
    %186 = vmatpush1.bf16.msra.mxu0 0
    %187 = vmatprep.subr.bf16.mxu0 0
    %188 = vmatpush1.bf16.msra.mxu0 0
    %189 = vmatprep.subr.bf16.mxu0 0
    %190 = vmatpush1.bf16.msra.mxu0 0
    %191 = vmatprep.subr.bf16.mxu0 0
    %192 = vmatpush1.bf16.msra.mxu0 0
    %193 = vmatprep.mubr.bf16.mxu0 0
    %194 = vmatmul.mubr.bf16.gmra.mrb[0].mxu0 %v159
    %v195 = vpop.f32.mrb[0].mxu0
    %v196 = vadd.f32 0.0, %v195
    %v197 = vpop.f32.mrb[0].mxu0
    %v198 = vadd.f32 0.0, %v197
    %v199 = vpop.f32.mrb[0].mxu0
    %v200 = vadd.f32 0.0, %v199
    %v201 = vpop.f32.mrb[0].mxu0
    %v202 = vadd.f32 0.0, %v201
    %203 = vdwg.mxu0
    %204 = vmatprep.subr.bf16.mxu0 %v128
    %205 = vmatpush1.bf16.msra.mxu0 %v127
    %206 = vmatprep.subr.bf16.mxu0 %v132
    %207 = vmatpush1.bf16.msra.mxu0 %v131
    %208 = vmatprep.subr.bf16.mxu0 %v136
    %209 = vmatpush1.bf16.msra.mxu0 %v135
    %210 = vmatprep.subr.bf16.mxu0 %v140
    %211 = vmatpush1.bf16.msra.mxu0 %v139
    %212 = vmatprep.subr.bf16.mxu0 0
    %213 = vmatpush1.bf16.msra.mxu0 0
    %214 = vmatprep.subr.bf16.mxu0 0
    %215 = vmatpush1.bf16.msra.mxu0 0
    %216 = vmatprep.subr.bf16.mxu0 0
    %217 = vmatpush1.bf16.msra.mxu0 0
    %218 = vmatprep.subr.bf16.mxu0 0
    %219 = vmatpush1.bf16.msra.mxu0 0
    %220 = vmatprep.subr.bf16.mxu0 0
    %221 = vmatpush1.bf16.msra.mxu0 0
    %222 = vmatprep.subr.bf16.mxu0 0
    %223 = vmatpush1.bf16.msra.mxu0 0
    %224 = vmatprep.subr.bf16.mxu0 0
    %225 = vmatpush1.bf16.msra.mxu0 0
    %226 = vmatprep.subr.bf16.mxu0 0
    %227 = vmatpush1.bf16.msra.mxu0 0
    %228 = vmatprep.subr.bf16.mxu0 0
    %229 = vmatpush1.bf16.msra.mxu0 0
    %230 = vmatprep.subr.bf16.mxu0 0
    %231 = vmatpush1.bf16.msra.mxu0 0
    %232 = vmatprep.subr.bf16.mxu0 0
    %233 = vmatpush1.bf16.msra.mxu0 0
    %234 = vmatprep.subr.bf16.mxu0 0
    %235 = vmatpush1.bf16.msra.mxu0 0
    %236 = vmatprep.mubr.bf16.mxu0 0
    %237 = vmatmul.mubr.bf16.gmra.mrb[0].mxu0 %v159
    %v238 = vpop.f32.mrb[0].mxu0
    %v239 = vadd.f32 0.0, %v238
    %v240 = vpop.f32.mrb[0].mxu0
    %v241 = vadd.f32 0.0, %v240
    %v242 = vpop.f32.mrb[0].mxu0
    %v243 = vadd.f32 0.0, %v242
    %v244 = vpop.f32.mrb[0].mxu0
    %v245 = vadd.f32 0.0, %v244
    %246 = vdwg.mxu0
    %v263 = vunpack.c.l.b16 %v44
    %v264 = vunpack.c.h.b16 %v44
    %v265 = vunpack.c.l.b16 %v45
    %v266 = vunpack.c.h.b16 %v45
    %v267 = vunpack.c.l.b16 %v46
    %v268 = vunpack.c.h.b16 %v46
    %v269 = vunpack.c.l.b16 %v47
    %v270 = vunpack.c.h.b16 %v47
    %v271 = vunpack.c.l.b16 %v48
    %v272 = vunpack.c.h.b16 %v48
    %v273 = vunpack.c.l.b16 %v49
    %v274 = vunpack.c.h.b16 %v49
    %v275 = vunpack.c.l.b16 %v50
    %v276 = vunpack.c.h.b16 %v50
    %v277 = vunpack.c.l.b16 %v51
    %v278 = vunpack.c.h.b16 %v51
    %v279 = vunpack.c.l.b16 %v52
    %v280 = vunpack.c.h.b16 %v52
    %v281 = vunpack.c.l.b16 %v53
    %v282 = vunpack.c.h.b16 %v53
    %v283 = vunpack.c.l.b16 %v54
    %v284 = vunpack.c.h.b16 %v54
    %v285 = vunpack.c.l.b16 %v55
    %v286 = vunpack.c.h.b16 %v55
    %v287 = vunpack.c.l.b16 %v56
    %v288 = vunpack.c.h.b16 %v56
    %v289 = vunpack.c.l.b16 %v57
    %v290 = vunpack.c.h.b16 %v57
    %v291 = vunpack.c.l.b16 %v58
    %v292 = vunpack.c.h.b16 %v58
    %v293 = vunpack.c.l.b16 %v59
    %v294 = vunpack.c.h.b16 %v59
    %v295 = vpack.c.b16 %v267, %v263
    %v296 = vpack.c.b16 %v268, %v264
    %v297 = vpack.c.b16 %v269, %v265
    %v298 = vpack.c.b16 %v270, %v266
    %v299 = vpack.c.b16 %v275, %v271
    %v300 = vpack.c.b16 %v276, %v272
    %v301 = vpack.c.b16 %v277, %v273
    %v302 = vpack.c.b16 %v278, %v274
    %v303 = vpack.c.b16 %v283, %v279
    %v304 = vpack.c.b16 %v284, %v280
    %v305 = vpack.c.b16 %v285, %v281
    %v306 = vpack.c.b16 %v286, %v282
    %v307 = vpack.c.b16 %v291, %v287
    %v308 = vpack.c.b16 %v292, %v288
    %v309 = vpack.c.b16 %v293, %v289
    %v310 = vpack.c.b16 %v294, %v290
    %327 = vmatprep.subr.bf16.mxu0 %v296
    %328 = vmatpush1.bf16.msra.mxu0 %v295
    %329 = vmatprep.subr.bf16.mxu0 %v300
    %330 = vmatpush1.bf16.msra.mxu0 %v299
    %331 = vmatprep.subr.bf16.mxu0 %v304
    %332 = vmatpush1.bf16.msra.mxu0 %v303
    %333 = vmatprep.subr.bf16.mxu0 %v308
    %334 = vmatpush1.bf16.msra.mxu0 %v307
    %335 = vmatprep.subr.bf16.mxu0 0
    %336 = vmatpush1.bf16.msra.mxu0 0
    %337 = vmatprep.subr.bf16.mxu0 0
    %338 = vmatpush1.bf16.msra.mxu0 0
    %339 = vmatprep.subr.bf16.mxu0 0
    %340 = vmatpush1.bf16.msra.mxu0 0
    %341 = vmatprep.subr.bf16.mxu0 0
    %342 = vmatpush1.bf16.msra.mxu0 0
    %343 = vmatprep.subr.bf16.mxu0 0
    %344 = vmatpush1.bf16.msra.mxu0 0
    %345 = vmatprep.subr.bf16.mxu0 0
    %346 = vmatpush1.bf16.msra.mxu0 0
    %347 = vmatprep.subr.bf16.mxu0 0
    %348 = vmatpush1.bf16.msra.mxu0 0
    %349 = vmatprep.subr.bf16.mxu0 0
    %350 = vmatpush1.bf16.msra.mxu0 0
    %351 = vmatprep.subr.bf16.mxu0 0
    %352 = vmatpush1.bf16.msra.mxu0 0
    %353 = vmatprep.subr.bf16.mxu0 0
    %354 = vmatpush1.bf16.msra.mxu0 0
    %355 = vmatprep.subr.bf16.mxu0 0
    %356 = vmatpush1.bf16.msra.mxu0 0
    %357 = vmatprep.subr.bf16.mxu0 0
    %358 = vmatpush1.bf16.msra.mxu0 0
    %359 = vmatprep.mubr.bf16.mxu0 0
    %360 = vmatmul.mubr.bf16.gmra.mrb[0].mxu0 %v159
    %v361 = vpop.f32.mrb[0].mxu0
    %v362 = vadd.f32 %v196, %v361
    %v363 = vpop.f32.mrb[0].mxu0
    %v364 = vadd.f32 %v198, %v363
    %v365 = vpop.f32.mrb[0].mxu0
    %v366 = vadd.f32 %v200, %v365
    %v367 = vpop.f32.mrb[0].mxu0
    %v368 = vadd.f32 %v202, %v367
    %369 = vdwg.mxu0
    %370 = vmatprep.subr.bf16.mxu0 %v298
    %371 = vmatpush1.bf16.msra.mxu0 %v297
    %372 = vmatprep.subr.bf16.mxu0 %v302
    %373 = vmatpush1.bf16.msra.mxu0 %v301
    %374 = vmatprep.subr.bf16.mxu0 %v306
    %375 = vmatpush1.bf16.msra.mxu0 %v305
    %376 = vmatprep.subr.bf16.mxu0 %v310
    %377 = vmatpush1.bf16.msra.mxu0 %v309
    %378 = vmatprep.subr.bf16.mxu0 0
    %379 = vmatpush1.bf16.msra.mxu0 0
    %380 = vmatprep.subr.bf16.mxu0 0
    %381 = vmatpush1.bf16.msra.mxu0 0
    %382 = vmatprep.subr.bf16.mxu0 0
    %383 = vmatpush1.bf16.msra.mxu0 0
    %384 = vmatprep.subr.bf16.mxu0 0
    %385 = vmatpush1.bf16.msra.mxu0 0
    %386 = vmatprep.subr.bf16.mxu0 0
    %387 = vmatpush1.bf16.msra.mxu0 0
    %388 = vmatprep.subr.bf16.mxu0 0
    %389 = vmatpush1.bf16.msra.mxu0 0
    %390 = vmatprep.subr.bf16.mxu0 0
    %391 = vmatpush1.bf16.msra.mxu0 0
    %392 = vmatprep.subr.bf16.mxu0 0
    %393 = vmatpush1.bf16.msra.mxu0 0
    %394 = vmatprep.subr.bf16.mxu0 0
    %395 = vmatpush1.bf16.msra.mxu0 0
    %396 = vmatprep.subr.bf16.mxu0 0
    %397 = vmatpush1.bf16.msra.mxu0 0
    %398 = vmatprep.subr.bf16.mxu0 0
    %399 = vmatpush1.bf16.msra.mxu0 0
    %400 = vmatprep.subr.bf16.mxu0 0
    %401 = vmatpush1.bf16.msra.mxu0 0
    %402 = vmatprep.mubr.bf16.mxu0 0
    %403 = vmatmul.mubr.bf16.gmra.mrb[0].mxu0 %v159
    %v404 = vpop.f32.mrb[0].mxu0
    %v405 = vadd.f32 %v239, %v404
    %v406 = vpop.f32.mrb[0].mxu0
    %v407 = vadd.f32 %v241, %v406
    %v408 = vpop.f32.mrb[0].mxu0
    %v409 = vadd.f32 %v243, %v408
    %v410 = vpop.f32.mrb[0].mxu0
    %v411 = vadd.f32 %v245, %v410
    %412 = vdwg.mxu0
    %s413 = scalar_lea.vmem [#allocation2], 256
    %v414 = vld [vmem:[%s413] sm:$0xff]
    %v415 = vld [vmem:[%s413 + $0x8] sm:$0xff]
    %v416 = vld [vmem:[%s413 + $0x10] sm:$0xff]
    %v417 = vld [vmem:[%s413 + $0x18] sm:$0xff]
    %v418 = vld [vmem:[%s413 + $0x20] sm:$0xff]
    %v419 = vld [vmem:[%s413 + $0x28] sm:$0xff]
    %v420 = vld [vmem:[%s413 + $0x30] sm:$0xff]
    %v421 = vld [vmem:[%s413 + $0x38] sm:$0xff]
    %v422 = vld [vmem:[%s413 + $0x40] sm:$0xff]
    %v423 = vld [vmem:[%s413 + $0x48] sm:$0xff]
    %v424 = vld [vmem:[%s413 + $0x50] sm:$0xff]
    %v425 = vld [vmem:[%s413 + $0x58] sm:$0xff]
    %v426 = vld [vmem:[%s413 + $0x60] sm:$0xff]
    %v427 = vld [vmem:[%s413 + $0x68] sm:$0xff]
    %v428 = vld [vmem:[%s413 + $0x70] sm:$0xff]
    %v429 = vld [vmem:[%s413 + $0x78] sm:$0xff]
    %v446 = vunpack.c.l.b16 %v414
    %v447 = vunpack.c.h.b16 %v414
    %v448 = vunpack.c.l.b16 %v415
    %v449 = vunpack.c.h.b16 %v415
    %v450 = vunpack.c.l.b16 %v416
    %v451 = vunpack.c.h.b16 %v416
    %v452 = vunpack.c.l.b16 %v417
    %v453 = vunpack.c.h.b16 %v417
    %v454 = vunpack.c.l.b16 %v418
    %v455 = vunpack.c.h.b16 %v418
    %v456 = vunpack.c.l.b16 %v419
    %v457 = vunpack.c.h.b16 %v419
    %v458 = vunpack.c.l.b16 %v420
    %v459 = vunpack.c.h.b16 %v420
    %v460 = vunpack.c.l.b16 %v421
    %v461 = vunpack.c.h.b16 %v421
    %v462 = vunpack.c.l.b16 %v422
    %v463 = vunpack.c.h.b16 %v422
    %v464 = vunpack.c.l.b16 %v423
    %v465 = vunpack.c.h.b16 %v423
    %v466 = vunpack.c.l.b16 %v424
    %v467 = vunpack.c.h.b16 %v424
    %v468 = vunpack.c.l.b16 %v425
    %v469 = vunpack.c.h.b16 %v425
    %v470 = vunpack.c.l.b16 %v426
    %v471 = vunpack.c.h.b16 %v426
    %v472 = vunpack.c.l.b16 %v427
    %v473 = vunpack.c.h.b16 %v427
    %v474 = vunpack.c.l.b16 %v428
    %v475 = vunpack.c.h.b16 %v428
    %v476 = vunpack.c.l.b16 %v429
    %v477 = vunpack.c.h.b16 %v429
    %v478 = vpack.c.b16 %v450, %v446
    %v479 = vpack.c.b16 %v451, %v447
    %v480 = vpack.c.b16 %v452, %v448
    %v481 = vpack.c.b16 %v453, %v449
    %v482 = vpack.c.b16 %v458, %v454
    %v483 = vpack.c.b16 %v459, %v455
    %v484 = vpack.c.b16 %v460, %v456
    %v485 = vpack.c.b16 %v461, %v457
    %v486 = vpack.c.b16 %v466, %v462
    %v487 = vpack.c.b16 %v467, %v463
    %v488 = vpack.c.b16 %v468, %v464
    %v489 = vpack.c.b16 %v469, %v465
    %v490 = vpack.c.b16 %v474, %v470
    %v491 = vpack.c.b16 %v475, %v471
    %v492 = vpack.c.b16 %v476, %v472
    %v493 = vpack.c.b16 %v477, %v473
    %510 = vmatprep.subr.bf16.mxu0 %v479
    %511 = vmatpush1.bf16.msra.mxu0 %v478
    %512 = vmatprep.subr.bf16.mxu0 %v483
    %513 = vmatpush1.bf16.msra.mxu0 %v482
    %514 = vmatprep.subr.bf16.mxu0 %v487
    %515 = vmatpush1.bf16.msra.mxu0 %v486
    %516 = vmatprep.subr.bf16.mxu0 %v491
    %517 = vmatpush1.bf16.msra.mxu0 %v490
    %518 = vmatprep.subr.bf16.mxu0 0
    %519 = vmatpush1.bf16.msra.mxu0 0
    %520 = vmatprep.subr.bf16.mxu0 0
    %521 = vmatpush1.bf16.msra.mxu0 0
    %522 = vmatprep.subr.bf16.mxu0 0
    %523 = vmatpush1.bf16.msra.mxu0 0
    %524 = vmatprep.subr.bf16.mxu0 0
    %525 = vmatpush1.bf16.msra.mxu0 0
    %526 = vmatprep.subr.bf16.mxu0 0
    %527 = vmatpush1.bf16.msra.mxu0 0
    %528 = vmatprep.subr.bf16.mxu0 0
    %529 = vmatpush1.bf16.msra.mxu0 0
    %530 = vmatprep.subr.bf16.mxu0 0
    %531 = vmatpush1.bf16.msra.mxu0 0
    %532 = vmatprep.subr.bf16.mxu0 0
    %533 = vmatpush1.bf16.msra.mxu0 0
    %534 = vmatprep.subr.bf16.mxu0 0
    %535 = vmatpush1.bf16.msra.mxu0 0
    %536 = vmatprep.subr.bf16.mxu0 0
    %537 = vmatpush1.bf16.msra.mxu0 0
    %538 = vmatprep.subr.bf16.mxu0 0
    %539 = vmatpush1.bf16.msra.mxu0 0
    %540 = vmatprep.subr.bf16.mxu0 0
    %541 = vmatpush1.bf16.msra.mxu0 0
    %542 = vmatprep.mubr.bf16.mxu0 0
    %543 = vmatmul.mubr.bf16.gmra.mrb[0].mxu0 %v159
    %v544 = vpop.f32.mrb[0].mxu0
    %v545 = vadd.f32 0.0, %v544
    %v546 = vpop.f32.mrb[0].mxu0
    %v547 = vadd.f32 0.0, %v546
    %v548 = vpop.f32.mrb[0].mxu0
    %v549 = vadd.f32 0.0, %v548
    %v550 = vpop.f32.mrb[0].mxu0
    %v551 = vadd.f32 0.0, %v550
    %552 = vdwg.mxu0
    %553 = vmatprep.subr.bf16.mxu0 %v481
    %554 = vmatpush1.bf16.msra.mxu0 %v480
    %555 = vmatprep.subr.bf16.mxu0 %v485
    %556 = vmatpush1.bf16.msra.mxu0 %v484
    %557 = vmatprep.subr.bf16.mxu0 %v489
    %558 = vmatpush1.bf16.msra.mxu0 %v488
    %559 = vmatprep.subr.bf16.mxu0 %v493
    %560 = vmatpush1.bf16.msra.mxu0 %v492
    %561 = vmatprep.subr.bf16.mxu0 0
    %562 = vmatpush1.bf16.msra.mxu0 0
    %563 = vmatprep.subr.bf16.mxu0 0
    %564 = vmatpush1.bf16.msra.mxu0 0
    %565 = vmatprep.subr.bf16.mxu0 0
    %566 = vmatpush1.bf16.msra.mxu0 0
    %567 = vmatprep.subr.bf16.mxu0 0
    %568 = vmatpush1.bf16.msra.mxu0 0
    %569 = vmatprep.subr.bf16.mxu0 0
    %570 = vmatpush1.bf16.msra.mxu0 0
    %571 = vmatprep.subr.bf16.mxu0 0
    %572 = vmatpush1.bf16.msra.mxu0 0
    %573 = vmatprep.subr.bf16.mxu0 0
    %574 = vmatpush1.bf16.msra.mxu0 0
    %575 = vmatprep.subr.bf16.mxu0 0
    %576 = vmatpush1.bf16.msra.mxu0 0
    %577 = vmatprep.subr.bf16.mxu0 0
    %578 = vmatpush1.bf16.msra.mxu0 0
    %579 = vmatprep.subr.bf16.mxu0 0
    %580 = vmatpush1.bf16.msra.mxu0 0
    %581 = vmatprep.subr.bf16.mxu0 0
    %582 = vmatpush1.bf16.msra.mxu0 0
    %583 = vmatprep.subr.bf16.mxu0 0
    %584 = vmatpush1.bf16.msra.mxu0 0
    %585 = vmatprep.mubr.bf16.mxu0 0
    %586 = vmatmul.mubr.bf16.gmra.mrb[0].mxu0 %v159
    %v587 = vpop.f32.mrb[0].mxu0
    %v588 = vadd.f32 0.0, %v587
    %v589 = vpop.f32.mrb[0].mxu0
    %v590 = vadd.f32 0.0, %v589
    %v591 = vpop.f32.mrb[0].mxu0
    %v592 = vadd.f32 0.0, %v591
    %v593 = vpop.f32.mrb[0].mxu0
    %v594 = vadd.f32 0.0, %v593
    %595 = vdwg.mxu0
    %v596 = vadd.f32 %v362, %v545
    %v597 = vadd.f32 %v364, %v547
    %v598 = vadd.f32 %v405, %v588
    %v599 = vadd.f32 %v407, %v590
    %v600 = vadd.f32 %v366, %v549
    %v601 = vadd.f32 %v368, %v551
    %v602 = vadd.f32 %v409, %v592
    %v603 = vadd.f32 %v411, %v594
    %604 = vst [vmem:[#allocation5] sm:$0xff] %v596
    %605 = vst [vmem:[#allocation5 + $0x8] sm:$0xff] %v597
    %606 = vst [vmem:[#allocation5 + $0x10] sm:$0xff] %v598
    %607 = vst [vmem:[#allocation5 + $0x18] sm:$0xff] %v599
    %608 = vst [vmem:[#allocation5 + $0x20] sm:$0xff] %v600
    %609 = vst [vmem:[#allocation5 + $0x28] sm:$0xff] %v601
    %610 = vst [vmem:[#allocation5 + $0x30] sm:$0xff] %v602
    %611 = vst [vmem:[#allocation5 + $0x38] sm:$0xff] %v603
    // Predicated region
    $region14: #{tpu_custom_call.1} parent=1 // pred_check
      _
    $region15: #{tpu_custom_call.1} parent=1 // pred_check_branch
      %613 = sbr.rel (0) target = $region17
    $region16: #{tpu_custom_call.1} parent=1 // pred_region
      %s615 = ssub.s32 1024, 1024
      %616 = vsyncadd [#allocation4], %s615
      %s617 = sshll.u32 [#allocation5], 4
      %s618 = int_to_ptr.vmem [resolvable:$true] %s617
      %623 = dma.vmem_to_hbm [thread:$0]  %s618, 1024, %s2, [#allocation4], 512, 512, 32
    $region17: #{tpu_custom_call.1} parent=1 // pred_fallthru
      _
    // Predicated region
    $region18: #{tpu_custom_call.1} parent=1 // pred_check
      _
    $region19: #{tpu_custom_call.1} parent=1 // pred_check_branch
      %625 = sbr.rel (0) target = $region21
    $region20: #{tpu_custom_call.1} parent=1 // pred_region
      %626 = dma.done [#allocation4], 1024
    $region21: #{tpu_custom_call.1} parent=1 // pred_fallthru
      _
    %627 = vsyncpa [#allocation3], 1
    %628 = vsyncpa [#allocation4], 1

</llo_original>
